<compile_context>
chip_gen: v7x
topology: tpu7x:2x2x1
jax: 0.10.0
libtpu: 0.0.40
codegen_flags: <defaults>
</compile_context>

<pallas_src>
import functools
import math

import jax
import jax.numpy as jnp
from jax.experimental import pallas as pl
from jax.experimental.pallas import tpu as pltpu

_SUB = 8          # f32 sublane pack for the batch (second-to-last) dim
_MAX_TILE = 8192


def _round_up(x, m):
    return (x + m - 1) // m * m


def _mlp_kernel(n_layers, compute_dtype, x_ref, *refs):
    """refs = (w1, b1, w2, b2, ..., wN, bN, out_ref)."""
    out_ref = refs[-1]
    param_refs = refs[:-1]
    h = x_ref[...]
    for i in range(n_layers):
        w = param_refs[2 * i][...]          # compute_dtype weights
        b = param_refs[2 * i + 1][...]      # f32 bias, shape (1, out_i)
        # MXU matmul with f32 accumulation; bias add + ReLU in f32 (v5e-safe).
        h = jnp.dot(h.astype(compute_dtype), w,
                    preferred_element_type=jnp.float32) + b
        if i < n_layers - 1:
            h = jnp.maximum(h, 0.0)
    out_ref[...] = h.astype(out_ref.dtype)


def deep_q_net_forward(x, weights, biases, *, batch_tile=2048,
                       compute_dtype=jnp.bfloat16,
                       vmem_limit_bytes=32 * 1024 * 1024):
    """Fused forward pass of DeepQNet_Torch.

    x:       (B, layer_sizes[0]) float array
    weights: list of (in_i, out_i) arrays (transposed PyTorch Linear weights)
    biases:  list of (out_i,) arrays
    """
    n_layers = len(weights)
    B, in_dim = x.shape
    out_dim = int(weights[-1].shape[1])
    widths = [in_dim] + [int(w.shape[1]) for w in weights]

    # ---- parameter prep (tiny): compute_dtype weights, f32 biases, NO padding.
    params = []
    for w, b in zip(weights, biases):
        params.append(jnp.asarray(w, jnp.float32).astype(compute_dtype))
        params.append(jnp.asarray(b, jnp.float32).reshape(1, -1))
    param_bytes = sum(int(p.size) * p.dtype.itemsize for p in params)

    x_itemsize = jnp.dtype(x.dtype).itemsize
    c_itemsize = jnp.dtype(compute_dtype).itemsize

    # ---- per-step VMEM footprint: double-buffered x/out/param blocks plus the
    #      in-kernel intermediates (f32 activations + compute_dtype MXU copies).
    def footprint(bt):
        xb = 2 * bt * in_dim * x_itemsize
        ob = 2 * bt * out_dim * 4
        pb = 2 * param_bytes
        interm = bt * sum(widths) * (4 + c_itemsize)
        return xb + ob + pb + interm

    budget = vmem_limit_bytes // 2                  # leave pipeline headroom

    # ---- batch tile selection: shrink if over budget, otherwise grow toward it.
    bt = max(_SUB, _round_up(min(int(batch_tile), max(B, _SUB)), _SUB))
    while footprint(bt) > budget and bt > _SUB:
        bt = max(_SUB, _round_up(bt // 2, _SUB))
    while (bt < _MAX_TILE
           and footprint(2 * bt) <= budget
           and 2 * bt <= _round_up(B, _SUB)
           and pl.cdiv(B, 2 * bt) >= 2):            # keep >=2 steps (v7x megacore)
        bt *= 2
    # Don't let one giant tile swallow a large batch: split so both v7x cores work.
    if B >= 256 and _round_up(B, bt) // bt == 1:
        bt = max(_SUB, _round_up(pl.cdiv(bt, 2), _SUB))
    assert bt % _SUB == 0

    B_pad = _round_up(B, bt)
    if B_pad != B:
        x = jnp.pad(x, ((0, B_pad - B), (0, 0)))
    grid = (B_pad // bt,)

    in_specs = [pl.BlockSpec((bt, in_dim), lambda i: (i, 0))]
    for p in params:
        # Parameters are tiny: keep the full arrays resident each grid step.
        in_specs.append(pl.BlockSpec(p.shape, lambda i: (0, 0)))
    out_specs = pl.BlockSpec((bt, out_dim), lambda i: (i, 0))

    flops = 2 * B_pad * sum(int(w.shape[0]) * int(w.shape[1]) for w in params[0::2])
    bytes_accessed = (B_pad * in_dim * x_itemsize + param_bytes
                      + B_pad * out_dim * 4)
    cost = pl.CostEstimate(flops=flops, transcendentals=0,
                           bytes_accessed=bytes_accessed)

    kernel = functools.partial(_mlp_kernel, n_layers, compute_dtype)
    out = pl.pallas_call(
        kernel,
        out_shape=jax.ShapeDtypeStruct((B_pad, out_dim), jnp.float32),
        grid=grid,
        in_specs=in_specs,
        out_specs=out_specs,
        compiler_params=pltpu.CompilerParams(
            dimension_semantics=("parallel",),
            vmem_limit_bytes=vmem_limit_bytes),
        cost_estimate=cost,
    )(x, *params)
    return out if B_pad == B else out[:B]


def _init_params(key, layer_sizes):
    """Deterministic PyTorch-style Linear init: U(-1/sqrt(fan_in), 1/sqrt(fan_in))."""
    weights, biases = [], []
    keys = jax.random.split(key, 2 * len(layer_sizes))
    for i in range(1, len(layer_sizes)):
        fan_in, fan_out = layer_sizes[i - 1], layer_sizes[i]
        bound = 1.0 / math.sqrt(fan_in)
        w = jax.random.uniform(keys[2 * i], (fan_in, fan_out), jnp.float32, -bound, bound)
        b = jax.random.uniform(keys[2 * i + 1], (fan_out,), jnp.float32, -bound, bound)
        weights.append(w)
        biases.append(b)
    return weights, biases


def _reference(x, weights, biases):
    ref = jnp.asarray(x, jnp.float32)
    for i, (w, b) in enumerate(zip(weights, biases)):
        ref = ref @ w + b
        if i < len(weights) - 1:
            ref = jnp.maximum(ref, 0.0)
    return ref


if __name__ == "__main__":
    key = jax.random.PRNGKey(0)
    k_x, k_x2, k_p = jax.random.split(key, 3)

    layer_sizes = [16, 32, 32, 4]   # state_dim=16, two hidden layers of 32, 4 actions
    weights, biases = _init_params(k_p, layer_sizes)

    # Small demo batch (single grid step).
    batch = 8
    x = jax.random.normal(k_x, (batch, layer_sizes[0]), jnp.float32)
    out = jax.block_until_ready(deep_q_net_forward(x, weights, biases))
    ref = _reference(x, weights, biases)
    assert out.shape == (batch, layer_sizes[-1])
    # bf16 MXU operands -> loosened tolerance vs. f32 reference.
    assert jnp.allclose(out, ref, atol=5e-2, rtol=5e-2), "mismatch vs reference (small batch)"

    # Larger batch exercising >=2 grid steps (pipelining / v7x megacore path).
    batch2 = 256
    x2 = jax.random.normal(k_x2, (batch2, layer_sizes[0]), jnp.float32)
    out2 = jax.block_until_ready(deep_q_net_forward(x2, weights, biases))
    ref2 = _reference(x2, weights, biases)
    assert out2.shape == (batch2, layer_sizes[-1])
    assert jnp.allclose(out2, ref2, atol=5e-2, rtol=5e-2), "mismatch vs reference (tiled batch)"

    # f32 compute path: near bit-faithful to the f32 PyTorch module (argmax-safe).
    out3 = jax.block_until_ready(
        deep_q_net_forward(x2, weights, biases, compute_dtype=jnp.float32))
    assert jnp.allclose(out3, ref2, atol=1e-3, rtol=1e-3), "mismatch vs reference (f32 path)"

    print("KERNEL_OK")
</pallas_src>

<mosaic_0001>
module attributes {stable_mosaic.version = 11 : i64} {
  func.func @_mlp_kernel(%arg0: i32, %arg1: memref<8x16xf32, #tpu.memory_space<vmem>>, %arg2: memref<16x32xbf16, #tpu.memory_space<vmem>>, %arg3: memref<1x32xf32, #tpu.memory_space<vmem>>, %arg4: memref<32x32xbf16, #tpu.memory_space<vmem>>, %arg5: memref<1x32xf32, #tpu.memory_space<vmem>>, %arg6: memref<32x4xbf16, #tpu.memory_space<vmem>>, %arg7: memref<1x4xf32, #tpu.memory_space<vmem>>, %arg8: memref<8x4xf32, #tpu.memory_space<vmem>>) attributes {dimension_semantics = [#tpu.dimension_semantics<parallel>], iteration_bounds = array<i64: 1>, scalar_prefetch = 0 : i64, scratch_operands = 0 : i64, tpu.core_type = #tpu.core_type<tc>, window_params = [{transform_indices = @transform_0, window_bounds = array<i64: 8, 16>}, {pipeline_mode = #tpu.pipeline_mode<synchronous>, transform_indices = @transform_1, window_bounds = array<i64: 16, 32>}, {pipeline_mode = #tpu.pipeline_mode<synchronous>, transform_indices = @transform_2, window_bounds = array<i64: 1, 32>}, {pipeline_mode = #tpu.pipeline_mode<synchronous>, transform_indices = @transform_3, window_bounds = array<i64: 32, 32>}, {pipeline_mode = #tpu.pipeline_mode<synchronous>, transform_indices = @transform_4, window_bounds = array<i64: 1, 32>}, {pipeline_mode = #tpu.pipeline_mode<synchronous>, transform_indices = @transform_5, window_bounds = array<i64: 32, 4>}, {pipeline_mode = #tpu.pipeline_mode<synchronous>, transform_indices = @transform_6, window_bounds = array<i64: 1, 4>}, {transform_indices = @transform_7, window_bounds = array<i64: 8, 4>}]} {
    %c0 = arith.constant 0 : index
    %c0_0 = arith.constant 0 : index
    %0 = vector.load %arg1[%c0, %c0_0] : memref<8x16xf32, #tpu.memory_space<vmem>>, vector<8x16xf32>
    %c0_1 = arith.constant 0 : index
    %c0_2 = arith.constant 0 : index
    %1 = vector.load %arg2[%c0_1, %c0_2] : memref<16x32xbf16, #tpu.memory_space<vmem>>, vector<16x32xbf16>
    %c0_3 = arith.constant 0 : index
    %c0_4 = arith.constant 0 : index
    %2 = vector.load %arg3[%c0_3, %c0_4] : memref<1x32xf32, #tpu.memory_space<vmem>>, vector<1x32xf32>
    %3 = arith.truncf %0 : vector<8x16xf32> to vector<8x16xbf16>
    %cst = arith.constant dense<0.000000e+00> : vector<8x32xf32>
    %4 = tpu.matmul %3, %1, %cst {dimension_numbers = #tpu.dot_dimension_numbers<[1], [0], [0], [1], [0, 0, 1, 1], [], []>} : vector<8x16xbf16>, vector<16x32xbf16>, vector<8x32xf32> -> vector<8x32xf32>
    %5 = vector.broadcast %2 : vector<1x32xf32> to vector<8x32xf32>
    %6 = arith.addf %4, %5 : vector<8x32xf32>
    %cst_5 = arith.constant 0.000000e+00 : f32
    %7 = vector.broadcast %cst_5 : f32 to vector<8x32xf32>
    %8 = arith.maximumf %6, %7 : vector<8x32xf32>
    %c0_6 = arith.constant 0 : index
    %c0_7 = arith.constant 0 : index
    %9 = vector.load %arg4[%c0_6, %c0_7] : memref<32x32xbf16, #tpu.memory_space<vmem>>, vector<32x32xbf16>
    %c0_8 = arith.constant 0 : index
    %c0_9 = arith.constant 0 : index
    %10 = vector.load %arg5[%c0_8, %c0_9] : memref<1x32xf32, #tpu.memory_space<vmem>>, vector<1x32xf32>
    %11 = arith.truncf %8 : vector<8x32xf32> to vector<8x32xbf16>
    %cst_10 = arith.constant dense<0.000000e+00> : vector<8x32xf32>
    %12 = tpu.matmul %11, %9, %cst_10 {dimension_numbers = #tpu.dot_dimension_numbers<[1], [0], [0], [1], [0, 0, 1, 1], [], []>} : vector<8x32xbf16>, vector<32x32xbf16>, vector<8x32xf32> -> vector<8x32xf32>
    %13 = vector.broadcast %10 : vector<1x32xf32> to vector<8x32xf32>
    %14 = arith.addf %12, %13 : vector<8x32xf32>
    %cst_11 = arith.constant 0.000000e+00 : f32
    %15 = vector.broadcast %cst_11 : f32 to vector<8x32xf32>
    %16 = arith.maximumf %14, %15 : vector<8x32xf32>
    %c0_12 = arith.constant 0 : index
    %c0_13 = arith.constant 0 : index
    %17 = vector.load %arg6[%c0_12, %c0_13] : memref<32x4xbf16, #tpu.memory_space<vmem>>, vector<32x4xbf16>
    %c0_14 = arith.constant 0 : index
    %c0_15 = arith.constant 0 : index
    %18 = vector.load %arg7[%c0_14, %c0_15] : memref<1x4xf32, #tpu.memory_space<vmem>>, vector<1x4xf32>
    %19 = arith.truncf %16 : vector<8x32xf32> to vector<8x32xbf16>
    %cst_16 = arith.constant dense<0.000000e+00> : vector<8x4xf32>
    %20 = tpu.matmul %19, %17, %cst_16 {dimension_numbers = #tpu.dot_dimension_numbers<[1], [0], [0], [1], [0, 0, 1, 1], [], []>} : vector<8x32xbf16>, vector<32x4xbf16>, vector<8x4xf32> -> vector<8x4xf32>
    %21 = vector.broadcast %18 : vector<1x4xf32> to vector<8x4xf32>
    %22 = arith.addf %20, %21 : vector<8x4xf32>
    %c0_17 = arith.constant 0 : index
    %c0_18 = arith.constant 0 : index
    %23 = vector.load %arg8[%c0_17, %c0_18] : memref<8x4xf32, #tpu.memory_space<vmem>>, vector<8x4xf32>
    tpu.vector_store %arg8[%c0_17, %c0_18], %22 {strides = array<i32>} : memref<8x4xf32, #tpu.memory_space<vmem>>, vector<8x4xf32>,
    return
  }
  func.func @transform_0(%arg0: i32) -> (i32, i32) {
    %c0_i32 = arith.constant 0 : i32
    %c0_i32_0 = arith.constant 0 : i32
    return %arg0, %c0_i32 : i32, i32
  }
  func.func @transform_1(%arg0: i32) -> (i32, i32) {
    %c0_i32 = arith.constant 0 : i32
    %c0_i32_0 = arith.constant 0 : i32
    %c0_i32_1 = arith.constant 0 : i32
    return %c0_i32, %c0_i32_0 : i32, i32
  }
  func.func @transform_2(%arg0: i32) -> (i32, i32) {
    %c0_i32 = arith.constant 0 : i32
    %c0_i32_0 = arith.constant 0 : i32
    %c0_i32_1 = arith.constant 0 : i32
    return %c0_i32, %c0_i32_0 : i32, i32
  }
  func.func @transform_3(%arg0: i32) -> (i32, i32) {
    %c0_i32 = arith.constant 0 : i32
    %c0_i32_0 = arith.constant 0 : i32
    %c0_i32_1 = arith.constant 0 : i32
    return %c0_i32, %c0_i32_0 : i32, i32
  }
  func.func @transform_4(%arg0: i32) -> (i32, i32) {
    %c0_i32 = arith.constant 0 : i32
    %c0_i32_0 = arith.constant 0 : i32
    %c0_i32_1 = arith.constant 0 : i32
    return %c0_i32, %c0_i32_0 : i32, i32
  }
  func.func @transform_5(%arg0: i32) -> (i32, i32) {
    %c0_i32 = arith.constant 0 : i32
    %c0_i32_0 = arith.constant 0 : i32
    %c0_i32_1 = arith.constant 0 : i32
    return %c0_i32, %c0_i32_0 : i32, i32
  }
  func.func @transform_6(%arg0: i32) -> (i32, i32) {
    %c0_i32 = arith.constant 0 : i32
    %c0_i32_0 = arith.constant 0 : i32
    %c0_i32_1 = arith.constant 0 : i32
    return %c0_i32, %c0_i32_0 : i32, i32
  }
  func.func @transform_7(%arg0: i32) -> (i32, i32) {
    %c0_i32 = arith.constant 0 : i32
    %c0_i32_0 = arith.constant 0 : i32
    return %arg0, %c0_i32 : i32, i32
  }
}

</mosaic_0001>

<llo_original>
// kernel: tpu_custom_call.1
$region0: #{tpu_custom_call.1}
  #allocation0 [shape = 'u32[]', space=smem, size = 0x4, offset = 0x4, fixed_abs, tag = 'smem constant byte address 0x4 - core index']
  #allocation1 [shape = 'u32[144,128]{1,0:T(1,128)}', space=vmem, size = 0x12000, scoped, tag = 'internal scratch']
  %s0 = inlined_call_operand.vmem [shape: f32[8,16], index: 0, kind: input, shape index: {}]
  %s1 = inlined_call_operand.hbm [shape: bf16[16,32], index: 1, kind: input, shape index: {}]
  %s2 = inlined_call_operand.vmem [shape: f32[1,32], index: 2, kind: input, shape index: {}]
  %s3 = inlined_call_operand.vmem [shape: bf16[32,32], index: 3, kind: input, shape index: {}]
  %s4 = inlined_call_operand.vmem [shape: f32[1,32], index: 4, kind: input, shape index: {}]
  %s5 = inlined_call_operand.vmem [shape: bf16[32,4], index: 5, kind: input, shape index: {}]
  %s6 = inlined_call_operand.vmem [shape: f32[1,4], index: 6, kind: input, shape index: {}]
  %s7 = inlined_call_operand.vmem [shape: f32[8,4], index: 7, kind: output, shape index: {}]
  %s8 = sld [smem:[#allocation0]]
  $region42: #{tpu_custom_call.1} parent=0
    _
  %s10 = ssub.s32 1, %s8
  %s11 = scalar_select 0, %s10, %s8
  $region1: #{tpu_custom_call.1} parent=0
    #allocation2 [shape = 'u8[4096]{0}', space=vmem, size = 0x1000, scoped, tag = 'input window, operand 1, single buffered']
    #allocation3 [shape = 's32[1]{0}', space=sflag, size = 0x4, scoped, tag = 'scoped memory for tpu_custom_call.1']
    %12 = vsyncpa [#allocation3], 0
    // Predicated region
    $region2: #{tpu_custom_call.1} parent=1 // pred_check
      _
    $region3: #{tpu_custom_call.1} parent=1 // pred_check_branch
      %14 = sbr.rel (0) target = $region5
    $region4: #{tpu_custom_call.1} parent=1 // pred_region
      _
    $region5: #{tpu_custom_call.1} parent=1 // pred_fallthru
      _
    // Predicated region
    $region6: #{tpu_custom_call.1} parent=1 // pred_check
      _
    $region7: #{tpu_custom_call.1} parent=1 // pred_check_branch
      %16 = sbr.rel (0) target = $region9
    $region8: #{tpu_custom_call.1} parent=1 // pred_region
      %s18 = ssub.s32 128, 128
      %19 = vsyncadd [#allocation3], %s18
      %s20 = sshll.u32 [#allocation2], 4
      %s21 = int_to_ptr.vmem [resolvable:$true] %s20
      %26 = dma.hbm_to_vmem [thread:$0]  %s1, 128, %s21, [#allocation3], 64, 64, 4
    $region9: #{tpu_custom_call.1} parent=1 // pred_fallthru
      _
    // Predicated region
    $region10: #{tpu_custom_call.1} parent=1 // pred_check
      _
    $region11: #{tpu_custom_call.1} parent=1 // pred_check_branch
      %28 = sbr.rel (0) target = $region13
    $region12: #{tpu_custom_call.1} parent=1 // pred_region
      _
    $region13: #{tpu_custom_call.1} parent=1 // pred_fallthru
      _
    // Predicated region
    $region14: #{tpu_custom_call.1} parent=1 // pred_check
      _
    $region15: #{tpu_custom_call.1} parent=1 // pred_check_branch
      %30 = sbr.rel (0) target = $region17
    $region16: #{tpu_custom_call.1} parent=1 // pred_region
      _
    $region17: #{tpu_custom_call.1} parent=1 // pred_fallthru
      _
    // Predicated region
    $region18: #{tpu_custom_call.1} parent=1 // pred_check
      _
    $region19: #{tpu_custom_call.1} parent=1 // pred_check_branch
      %32 = sbr.rel (0) target = $region21
    $region20: #{tpu_custom_call.1} parent=1 // pred_region
      _
    $region21: #{tpu_custom_call.1} parent=1 // pred_fallthru
      _
    // Predicated region
    $region22: #{tpu_custom_call.1} parent=1 // pred_check
      _
    $region23: #{tpu_custom_call.1} parent=1 // pred_check_branch
      %34 = sbr.rel (0) target = $region25
    $region24: #{tpu_custom_call.1} parent=1 // pred_region
      _
    $region25: #{tpu_custom_call.1} parent=1 // pred_fallthru
      _
    // Predicated region
    $region26: #{tpu_custom_call.1} parent=1 // pred_check
      _
    $region27: #{tpu_custom_call.1} parent=1 // pred_check_branch
      %36 = sbr.rel (0) target = $region29
    $region28: #{tpu_custom_call.1} parent=1 // pred_region
      _
    $region29: #{tpu_custom_call.1} parent=1 // pred_fallthru
      _
    // Predicated region
    $region30: #{tpu_custom_call.1} parent=1 // pred_check
      _
    $region31: #{tpu_custom_call.1} parent=1 // pred_check_branch
      %38 = sbr.rel (0) target = $region33
    $region32: #{tpu_custom_call.1} parent=1 // pred_region
      %39 = dma.done [#allocation3], 128
    $region33: #{tpu_custom_call.1} parent=1 // pred_fallthru
      _
    %v41 = vld [vmem:[%s0] sm:$0xff]
    %v42 = vld [vmem:[#allocation2] sm:$0xf]
    %v43 = vld [vmem:[#allocation2 + $0x4] sm:$0xf]
    %v44 = vld [vmem:[%s2] sm:$0x1]
    %v45 = vpack.c.bf16 %v41, %v41
    %v47 = vlaneseq
    %v48 = vshrl.u32 %v47, 7
    %v49 = vsub.s32 0, %v48
    %v50 = vrot.slane %v44, %v49
    %v54 = vunpack.c.l.b16 %v42
    %v55 = vunpack.c.l.b16 %v43
    %v56 = vpack.c.b16 %v55, %v54
    %vm58 = vcmask 130048
    %v60 = vsel %vm58, %v45, 0
    %62 = vmatprep.subr.bf16.mxu0 0
    %63 = vmatpush1.bf16.msra.mxu0 %v56
    %64 = vmatprep.subr.bf16.mxu0 0
    %65 = vmatpush1.bf16.msra.mxu0 0
    %66 = vmatprep.subr.bf16.mxu0 0
    %67 = vmatpush1.bf16.msra.mxu0 0
    %68 = vmatprep.subr.bf16.mxu0 0
    %69 = vmatpush1.bf16.msra.mxu0 0
    %70 = vmatprep.subr.bf16.mxu0 0
    %71 = vmatpush1.bf16.msra.mxu0 0
    %72 = vmatprep.subr.bf16.mxu0 0
    %73 = vmatpush1.bf16.msra.mxu0 0
    %74 = vmatprep.subr.bf16.mxu0 0
    %75 = vmatpush1.bf16.msra.mxu0 0
    %76 = vmatprep.subr.bf16.mxu0 0
    %77 = vmatpush1.bf16.msra.mxu0 0
    %78 = vmatprep.subr.bf16.mxu0 0
    %79 = vmatpush1.bf16.msra.mxu0 0
    %80 = vmatprep.subr.bf16.mxu0 0
    %81 = vmatpush1.bf16.msra.mxu0 0
    %82 = vmatprep.subr.bf16.mxu0 0
    %83 = vmatpush1.bf16.msra.mxu0 0
    %84 = vmatprep.subr.bf16.mxu0 0
    %85 = vmatpush1.bf16.msra.mxu0 0
    %86 = vmatprep.subr.bf16.mxu0 0
    %87 = vmatpush1.bf16.msra.mxu0 0
    %88 = vmatprep.subr.bf16.mxu0 0
    %89 = vmatpush1.bf16.msra.mxu0 0
    %90 = vmatprep.subr.bf16.mxu0 0
    %91 = vmatpush1.bf16.msra.mxu0 0
    %92 = vmatprep.subr.bf16.mxu0 0
    %93 = vmatpush1.bf16.msra.mxu0 0
    %94 = vmatprep.mubr.bf16.mxu0 0
    %95 = vmatmul.mubr.bf16.gmra.mrb[0].mxu0 %v60
    %v96 = vpop.f32.mrb[0].mxu0
    %v97 = vadd.f32 %v50, %v96
    %v98 = vpop.f32.mrb[0].mxu0
    %v99 = vpop.f32.mrb[0].mxu0
    %v100 = vpop.f32.mrb[0].mxu0
    %101 = vdwg.mxu0
    %v102 = vmax.f32 %v97, 0.0
    %v103 = vld [vmem:[%s3] sm:$0xf]
    %v104 = vld [vmem:[%s3 + $0x4] sm:$0xf]
    %v105 = vld [vmem:[%s3 + $0x8] sm:$0xf]
    %v106 = vld [vmem:[%s3 + $0xc] sm:$0xf]
    %v107 = vld [vmem:[%s4] sm:$0x1]
    %v108 = vpack.c.bf16 %v102, %v102
    %v110 = vlaneseq
    %v111 = vshrl.u32 %v110, 7
    %v112 = vsub.s32 0, %v111
    %v113 = vrot.slane %v107, %v112
    %v119 = vunpack.c.l.b16 %v103
    %v120 = vunpack.c.l.b16 %v104
    %v121 = vunpack.c.l.b16 %v105
    %v122 = vunpack.c.l.b16 %v106
    %v123 = vpack.c.b16 %v120, %v119
    %v124 = vpack.c.b16 %v122, %v121
    %vm127 = vcmask 261120
    %v129 = vsel %vm127, %v108, 0
    %131 = vmatprep.subr.bf16.mxu0 0
    %132 = vmatpush1.bf16.msra.mxu0 %v123
    %133 = vmatprep.subr.bf16.mxu0 0
    %134 = vmatpush1.bf16.msra.mxu0 %v124
    %135 = vmatprep.subr.bf16.mxu0 0
    %136 = vmatpush1.bf16.msra.mxu0 0
    %137 = vmatprep.subr.bf16.mxu0 0
    %138 = vmatpush1.bf16.msra.mxu0 0
    %139 = vmatprep.subr.bf16.mxu0 0
    %140 = vmatpush1.bf16.msra.mxu0 0
    %141 = vmatprep.subr.bf16.mxu0 0
    %142 = vmatpush1.bf16.msra.mxu0 0
    %143 = vmatprep.subr.bf16.mxu0 0
    %144 = vmatpush1.bf16.msra.mxu0 0
    %145 = vmatprep.subr.bf16.mxu0 0
    %146 = vmatpush1.bf16.msra.mxu0 0
    %147 = vmatprep.subr.bf16.mxu0 0
    %148 = vmatpush1.bf16.msra.mxu0 0
    %149 = vmatprep.subr.bf16.mxu0 0
    %150 = vmatpush1.bf16.msra.mxu0 0
    %151 = vmatprep.subr.bf16.mxu0 0
    %152 = vmatpush1.bf16.msra.mxu0 0
    %153 = vmatprep.subr.bf16.mxu0 0
    %154 = vmatpush1.bf16.msra.mxu0 0
    %155 = vmatprep.subr.bf16.mxu0 0
    %156 = vmatpush1.bf16.msra.mxu0 0
    %157 = vmatprep.subr.bf16.mxu0 0
    %158 = vmatpush1.bf16.msra.mxu0 0
    %159 = vmatprep.subr.bf16.mxu0 0
    %160 = vmatpush1.bf16.msra.mxu0 0
    %161 = vmatprep.subr.bf16.mxu0 0
    %162 = vmatpush1.bf16.msra.mxu0 0
    %163 = vmatprep.mubr.bf16.mxu0 0
    %164 = vmatmul.mubr.bf16.gmra.mrb[0].mxu0 %v129
    %v165 = vpop.f32.mrb[0].mxu0
    %v166 = vadd.f32 %v113, %v165
    %v167 = vpop.f32.mrb[0].mxu0
    %v168 = vpop.f32.mrb[0].mxu0
    %v169 = vpop.f32.mrb[0].mxu0
    %170 = vdwg.mxu0
    %v171 = vmax.f32 %v166, 0.0
    %v172 = vld [vmem:[%s5] sm:$0xf]
    %v173 = vld [vmem:[%s5 + $0x4] sm:$0xf]
    %v174 = vld [vmem:[%s5 + $0x8] sm:$0xf]
    %v175 = vld [vmem:[%s5 + $0xc] sm:$0xf]
    %v176 = vld [vmem:[%s6] sm:$0x1]
    %v177 = vpack.c.bf16 %v171, %v171
    %v179 = vlaneseq
    %v180 = vshrl.u32 %v179, 7
    %v181 = vsub.s32 0, %v180
    %v182 = vrot.slane %v176, %v181
    %v188 = vunpack.c.l.b16 %v172
    %v189 = vunpack.c.l.b16 %v173
    %v190 = vunpack.c.l.b16 %v174
    %v191 = vunpack.c.l.b16 %v175
    %v192 = vpack.c.b16 %v189, %v188
    %v193 = vpack.c.b16 %v191, %v190
    %v197 = vsel %vm127, %v177, 0
    %199 = vmatprep.subr.bf16.mxu0 0
    %200 = vmatpush1.bf16.msra.mxu0 %v192
    %201 = vmatprep.subr.bf16.mxu0 0
    %202 = vmatpush1.bf16.msra.mxu0 %v193
    %203 = vmatprep.subr.bf16.mxu0 0
    %204 = vmatpush1.bf16.msra.mxu0 0
    %205 = vmatprep.subr.bf16.mxu0 0
    %206 = vmatpush1.bf16.msra.mxu0 0
    %207 = vmatprep.subr.bf16.mxu0 0
    %208 = vmatpush1.bf16.msra.mxu0 0
    %209 = vmatprep.subr.bf16.mxu0 0
    %210 = vmatpush1.bf16.msra.mxu0 0
    %211 = vmatprep.subr.bf16.mxu0 0
    %212 = vmatpush1.bf16.msra.mxu0 0
    %213 = vmatprep.subr.bf16.mxu0 0
    %214 = vmatpush1.bf16.msra.mxu0 0
    %215 = vmatprep.subr.bf16.mxu0 0
    %216 = vmatpush1.bf16.msra.mxu0 0
    %217 = vmatprep.subr.bf16.mxu0 0
    %218 = vmatpush1.bf16.msra.mxu0 0
    %219 = vmatprep.subr.bf16.mxu0 0
    %220 = vmatpush1.bf16.msra.mxu0 0
    %221 = vmatprep.subr.bf16.mxu0 0
    %222 = vmatpush1.bf16.msra.mxu0 0
    %223 = vmatprep.subr.bf16.mxu0 0
    %224 = vmatpush1.bf16.msra.mxu0 0
    %225 = vmatprep.subr.bf16.mxu0 0
    %226 = vmatpush1.bf16.msra.mxu0 0
    %227 = vmatprep.subr.bf16.mxu0 0
    %228 = vmatpush1.bf16.msra.mxu0 0
    %229 = vmatprep.subr.bf16.mxu0 0
    %230 = vmatpush1.bf16.msra.mxu0 0
    %231 = vmatprep.mubr.bf16.mxu0 0
    %232 = vmatmul.mubr.bf16.gmra.mrb[0].mxu0 %v197
    %v233 = vpop.f32.mrb[0].mxu0
    %v234 = vadd.f32 %v182, %v233
    %v235 = vpop.f32.mrb[0].mxu0
    %v236 = vpop.f32.mrb[0].mxu0
    %v237 = vpop.f32.mrb[0].mxu0
    %238 = vdwg.mxu0
    %vm239 = vcmask 31744
    %240 = vst.msk [vmem:[%s7] sm:$0xff] %vm239, %v234
    // Predicated region
    $region34: #{tpu_custom_call.1} parent=1 // pred_check
      _
    $region35: #{tpu_custom_call.1} parent=1 // pred_check_branch
      %242 = sbr.rel (0) target = $region37
    $region36: #{tpu_custom_call.1} parent=1 // pred_region
      _
    $region37: #{tpu_custom_call.1} parent=1 // pred_fallthru
      _
    // Predicated region
    $region38: #{tpu_custom_call.1} parent=1 // pred_check
      _
    $region39: #{tpu_custom_call.1} parent=1 // pred_check_branch
      %244 = sbr.rel (0) target = $region41
    $region40: #{tpu_custom_call.1} parent=1 // pred_region
      _
    $region41: #{tpu_custom_call.1} parent=1 // pred_fallthru
      _
    %245 = vsyncpa [#allocation3], 1

</llo_original>
